<compile_context>
chip_gen: v7x
topology: tpu7x:2x2x1
jax: 0.10.0
libtpu: 0.0.40
codegen_flags: <defaults>
</compile_context>

<pallas_src>
import jax
import jax.numpy as jnp
from jax.experimental import pallas as pl
from jax.experimental.pallas import tpu as pltpu


# ----------------------------------------------------------------------------
# Fixed valid-grid mask (identical to the PyTorch buffer, shape (1, 1, 10, 8)).
# ----------------------------------------------------------------------------
_VALID_POSITIONS = [
    (0, 4), (1, 2), (1, 3), (2, 2), (2, 3), (3, 2), (3, 3), (3, 4), (3, 5),
    (4, 2), (4, 3), (4, 4), (4, 5), (5, 3), (5, 4), (5, 5), (5, 6), (6, 4),
    (6, 5), (6, 6), (7, 4), (7, 5), (7, 6), (8, 5), (8, 6), (9, 5), (9, 6),
    (9, 7),
]
_H, _W = 10, 8


def make_valid_mask() -> jnp.ndarray:
    mask = jnp.zeros((_H, _W), dtype=jnp.float32)
    rows = jnp.array([p[0] for p in _VALID_POSITIONS], dtype=jnp.int32)
    cols = jnp.array([p[1] for p in _VALID_POSITIONS], dtype=jnp.int32)
    mask = mask.at[rows, cols].set(1.0)
    return mask.reshape(1, 1, _H, _W)


# ----------------------------------------------------------------------------
# Pallas kernel: per-pixel 1x1-conv MLP + sigmoid + mask + residual gate.
#   x_ref : (B, C, H*W)   VMEM  (pixels on lanes, channels on sublanes)
#   m_ref : (1, H*W)      VMEM  (valid-grid mask, broadcast over batch)
#   w1/b1/w2/b2 : tiny parameter arrays in SMEM (scalar reads)
#   o_ref : (B, C, H*W)   VMEM
# ----------------------------------------------------------------------------
def _mask_attention_kernel(x_ref, m_ref, w1_ref, b1_ref, w2_ref, b2_ref, o_ref):
    x = x_ref[...].astype(jnp.float32)                      # (B, C, HW)
    Bsz, C, HW = x_ref.shape
    Ch = w1_ref.shape[1]                                     # C // 2

    # z = W2 @ relu(W1 @ x_pixel + b1) + b2, unrolled as VPU scalar-broadcast
    # FMAs over the tiny channel dims (C=4, Ch=2).  Everything stays (B, HW).
    z = jnp.zeros((Bsz, HW), dtype=jnp.float32) + b2_ref[0, 0]
    for j in range(Ch):
        acc = jnp.zeros((Bsz, HW), dtype=jnp.float32) + b1_ref[0, j]
        for c in range(C):
            acc = acc + w1_ref[c, j] * x[:, c, :]
        z = z + w2_ref[j, 0] * jnp.maximum(acc, 0.0)         # ReLU then scale

    # Sigmoid (exp lands on the EUP); very negative z saturates cleanly to 0.
    attn = 1.0 / (1.0 + jnp.exp(-z))                         # (B, HW)
    attn = attn * m_ref[...]                                 # apply valid-grid mask

    # Residual gate: out = x * attn + x  (attn broadcast over channels).
    o_ref[...] = (x * attn[:, None, :] + x).astype(o_ref.dtype)


def irregular_grid_mask_attention(x_nchw, w1, b1, w2, b2, valid_mask):
    """x_nchw: (B, C, 10, 8) float32.  Returns (B, C, 10, 8) float32."""
    B, C, H, W = x_nchw.shape
    assert (H, W) == (_H, _W), "valid_mask is fixed at 10x8 spatial"
    HW = H * W

    # Pure reshapes only -- no transposes around the kernel.
    x3 = x_nchw.reshape(B, C, HW)                            # pixels on lanes
    m2 = valid_mask.reshape(1, HW).astype(jnp.float32)       # (1, 80) slab

    out3 = pl.pallas_call(
        _mask_attention_kernel,
        out_shape=jax.ShapeDtypeStruct((B, C, HW), x_nchw.dtype),
        in_specs=[
            pl.BlockSpec(memory_space=pltpu.MemorySpace.VMEM),   # x (whole)
            pl.BlockSpec(memory_space=pltpu.MemorySpace.VMEM),   # mask (whole)
            pl.BlockSpec(memory_space=pltpu.MemorySpace.SMEM),   # W1
            pl.BlockSpec(memory_space=pltpu.MemorySpace.SMEM),   # b1
            pl.BlockSpec(memory_space=pltpu.MemorySpace.SMEM),   # W2
            pl.BlockSpec(memory_space=pltpu.MemorySpace.SMEM),   # b2
        ],
        out_specs=pl.BlockSpec(memory_space=pltpu.MemorySpace.VMEM),
    )(x3, m2, w1, b1, w2, b2)

    return out3.reshape(B, C, H, W)


# ----------------------------------------------------------------------------
# Pure-JAX reference (mirrors the PyTorch forward) for a sanity check.
# ----------------------------------------------------------------------------
def reference_forward(x_nchw, w1, b1, w2, b2, valid_mask):
    x_nhwc = jnp.transpose(x_nchw, (0, 2, 3, 1))                       # (B,H,W,C)
    h = jnp.maximum(jnp.einsum("bhwc,cd->bhwd", x_nhwc, w1) + b1[0], 0.0)
    z = jnp.einsum("bhwd,de->bhwe", h, w2) + b2[0]
    attn = jax.nn.sigmoid(z)                                           # (B,H,W,1)
    attn_nchw = jnp.transpose(attn, (0, 3, 1, 2))                      # (B,1,H,W)
    attn_nchw = attn_nchw * valid_mask
    return x_nchw * attn_nchw + x_nchw


if __name__ == "__main__":
    # Small shapes consistent with the module: spatial must be 10x8 (valid_mask).
    B, C = 2, 4
    Ch = C // 2

    key = jax.random.PRNGKey(0)
    kx, kw1, kb1, kw2, kb2 = jax.random.split(key, 5)

    x = jax.random.normal(kx, (B, C, _H, _W), dtype=jnp.float32)

    # Deterministic synthetic parameters (same shapes as the PyTorch 1x1 convs).
    # Conv2d(C, C//2, 1): weight (C//2, C, 1, 1) -> stored here as (C, C//2).
    w1 = (jax.random.uniform(kw1, (C, Ch), dtype=jnp.float32) - 0.5) * 0.5
    b1 = (jax.random.uniform(kb1, (1, Ch), dtype=jnp.float32) - 0.5) * 0.5
    # Conv2d(C//2, 1, 1): weight (1, C//2, 1, 1) -> stored here as (C//2, 1).
    w2 = (jax.random.uniform(kw2, (Ch, 1), dtype=jnp.float32) - 0.5) * 0.5
    b2 = (jax.random.uniform(kb2, (1, 1), dtype=jnp.float32) - 0.5) * 0.5

    valid_mask = make_valid_mask()

    out = irregular_grid_mask_attention(x, w1, b1, w2, b2, valid_mask)
    out = jax.block_until_ready(out)

    ref = reference_forward(x, w1, b1, w2, b2, valid_mask)
    assert out.shape == (B, C, _H, _W)
    assert jnp.allclose(out, ref, atol=1e-5, rtol=1e-5), "mismatch vs reference"

    print("KERNEL_OK")
</pallas_src>

<mosaic_0001>
module attributes {stable_mosaic.version = 11 : i64} {
  func.func @_mask_attention_kernel(%arg0: memref<2x4x80xf32, #tpu.memory_space<vmem>>, %arg1: memref<1x80xf32, #tpu.memory_space<vmem>>, %arg2: memref<4x2xf32, #tpu.memory_space<smem>>, %arg3: memref<1x2xf32, #tpu.memory_space<smem>>, %arg4: memref<2x1xf32, #tpu.memory_space<smem>>, %arg5: memref<1x1xf32, #tpu.memory_space<smem>>, %arg6: memref<2x4x80xf32, #tpu.memory_space<vmem>>) attributes {dimension_semantics = [], scalar_prefetch = 0 : i64, scratch_operands = 0 : i64, tpu.core_type = #tpu.core_type<tc>} {
    %c0 = arith.constant 0 : index
    %c0_0 = arith.constant 0 : index
    %c0_1 = arith.constant 0 : index
    %0 = vector.load %arg0[%c0, %c0_0, %c0_1] : memref<2x4x80xf32, #tpu.memory_space<vmem>>, vector<2x4x80xf32>
    %cst = arith.constant 0.000000e+00 : f32
    %1 = vector.broadcast %cst : f32 to vector<2x80xf32>
    %c0_2 = arith.constant 0 : index
    %c0_3 = arith.constant 0 : index
    %2 = memref.load %arg5[%c0_2, %c0_3] : memref<1x1xf32, #tpu.memory_space<smem>>
    %3 = vector.broadcast %2 : f32 to vector<2x80xf32>
    %4 = arith.addf %1, %3 : vector<2x80xf32>
    %cst_4 = arith.constant 0.000000e+00 : f32
    %5 = vector.broadcast %cst_4 : f32 to vector<2x80xf32>
    %c0_5 = arith.constant 0 : index
    %c0_6 = arith.constant 0 : index
    %6 = memref.load %arg3[%c0_5, %c0_6] : memref<1x2xf32, #tpu.memory_space<smem>>
    %7 = vector.broadcast %6 : f32 to vector<2x80xf32>
    %8 = arith.addf %5, %7 : vector<2x80xf32>
    %c0_7 = arith.constant 0 : index
    %c0_8 = arith.constant 0 : index
    %9 = memref.load %arg2[%c0_7, %c0_8] : memref<4x2xf32, #tpu.memory_space<smem>>
    %10 = vector.extract_strided_slice %0 {offsets = [0, 0, 0], sizes = [2, 1, 80], strides = [1, 1, 1]} : vector<2x4x80xf32> to vector<2x1x80xf32>
    %11 = vector.shape_cast %10 : vector<2x1x80xf32> to vector<2x80xf32>
    %12 = vector.broadcast %9 : f32 to vector<2x80xf32>
    %13 = arith.mulf %12, %11 : vector<2x80xf32>
    %14 = arith.addf %8, %13 : vector<2x80xf32>
    %c1 = arith.constant 1 : index
    %c0_9 = arith.constant 0 : index
    %15 = memref.load %arg2[%c1, %c0_9] : memref<4x2xf32, #tpu.memory_space<smem>>
    %16 = vector.extract_strided_slice %0 {offsets = [0, 1, 0], sizes = [2, 1, 80], strides = [1, 1, 1]} : vector<2x4x80xf32> to vector<2x1x80xf32>
    %17 = vector.shape_cast %16 : vector<2x1x80xf32> to vector<2x80xf32>
    %18 = vector.broadcast %15 : f32 to vector<2x80xf32>
    %19 = arith.mulf %18, %17 : vector<2x80xf32>
    %20 = arith.addf %14, %19 : vector<2x80xf32>
    %c2 = arith.constant 2 : index
    %c0_10 = arith.constant 0 : index
    %21 = memref.load %arg2[%c2, %c0_10] : memref<4x2xf32, #tpu.memory_space<smem>>
    %22 = vector.extract_strided_slice %0 {offsets = [0, 2, 0], sizes = [2, 1, 80], strides = [1, 1, 1]} : vector<2x4x80xf32> to vector<2x1x80xf32>
    %23 = vector.shape_cast %22 : vector<2x1x80xf32> to vector<2x80xf32>
    %24 = vector.broadcast %21 : f32 to vector<2x80xf32>
    %25 = arith.mulf %24, %23 : vector<2x80xf32>
    %26 = arith.addf %20, %25 : vector<2x80xf32>
    %c3 = arith.constant 3 : index
    %c0_11 = arith.constant 0 : index
    %27 = memref.load %arg2[%c3, %c0_11] : memref<4x2xf32, #tpu.memory_space<smem>>
    %28 = vector.extract_strided_slice %0 {offsets = [0, 3, 0], sizes = [2, 1, 80], strides = [1, 1, 1]} : vector<2x4x80xf32> to vector<2x1x80xf32>
    %29 = vector.shape_cast %28 : vector<2x1x80xf32> to vector<2x80xf32>
    %30 = vector.broadcast %27 : f32 to vector<2x80xf32>
    %31 = arith.mulf %30, %29 : vector<2x80xf32>
    %32 = arith.addf %26, %31 : vector<2x80xf32>
    %c0_12 = arith.constant 0 : index
    %c0_13 = arith.constant 0 : index
    %33 = memref.load %arg4[%c0_12, %c0_13] : memref<2x1xf32, #tpu.memory_space<smem>>
    %cst_14 = arith.constant 0.000000e+00 : f32
    %34 = vector.broadcast %cst_14 : f32 to vector<2x80xf32>
    %35 = arith.maximumf %32, %34 : vector<2x80xf32>
    %36 = vector.broadcast %33 : f32 to vector<2x80xf32>
    %37 = arith.mulf %36, %35 : vector<2x80xf32>
    %38 = arith.addf %4, %37 : vector<2x80xf32>
    %cst_15 = arith.constant 0.000000e+00 : f32
    %39 = vector.broadcast %cst_15 : f32 to vector<2x80xf32>
    %c0_16 = arith.constant 0 : index
    %c1_17 = arith.constant 1 : index
    %40 = memref.load %arg3[%c0_16, %c1_17] : memref<1x2xf32, #tpu.memory_space<smem>>
    %41 = vector.broadcast %40 : f32 to vector<2x80xf32>
    %42 = arith.addf %39, %41 : vector<2x80xf32>
    %c0_18 = arith.constant 0 : index
    %c1_19 = arith.constant 1 : index
    %43 = memref.load %arg2[%c0_18, %c1_19] : memref<4x2xf32, #tpu.memory_space<smem>>
    %44 = vector.extract_strided_slice %0 {offsets = [0, 0, 0], sizes = [2, 1, 80], strides = [1, 1, 1]} : vector<2x4x80xf32> to vector<2x1x80xf32>
    %45 = vector.shape_cast %44 : vector<2x1x80xf32> to vector<2x80xf32>
    %46 = vector.broadcast %43 : f32 to vector<2x80xf32>
    %47 = arith.mulf %46, %45 : vector<2x80xf32>
    %48 = arith.addf %42, %47 : vector<2x80xf32>
    %c1_20 = arith.constant 1 : index
    %c1_21 = arith.constant 1 : index
    %49 = memref.load %arg2[%c1_20, %c1_21] : memref<4x2xf32, #tpu.memory_space<smem>>
    %50 = vector.extract_strided_slice %0 {offsets = [0, 1, 0], sizes = [2, 1, 80], strides = [1, 1, 1]} : vector<2x4x80xf32> to vector<2x1x80xf32>
    %51 = vector.shape_cast %50 : vector<2x1x80xf32> to vector<2x80xf32>
    %52 = vector.broadcast %49 : f32 to vector<2x80xf32>
    %53 = arith.mulf %52, %51 : vector<2x80xf32>
    %54 = arith.addf %48, %53 : vector<2x80xf32>
    %c2_22 = arith.constant 2 : index
    %c1_23 = arith.constant 1 : index
    %55 = memref.load %arg2[%c2_22, %c1_23] : memref<4x2xf32, #tpu.memory_space<smem>>
    %56 = vector.extract_strided_slice %0 {offsets = [0, 2, 0], sizes = [2, 1, 80], strides = [1, 1, 1]} : vector<2x4x80xf32> to vector<2x1x80xf32>
    %57 = vector.shape_cast %56 : vector<2x1x80xf32> to vector<2x80xf32>
    %58 = vector.broadcast %55 : f32 to vector<2x80xf32>
    %59 = arith.mulf %58, %57 : vector<2x80xf32>
    %60 = arith.addf %54, %59 : vector<2x80xf32>
    %c3_24 = arith.constant 3 : index
    %c1_25 = arith.constant 1 : index
    %61 = memref.load %arg2[%c3_24, %c1_25] : memref<4x2xf32, #tpu.memory_space<smem>>
    %62 = vector.extract_strided_slice %0 {offsets = [0, 3, 0], sizes = [2, 1, 80], strides = [1, 1, 1]} : vector<2x4x80xf32> to vector<2x1x80xf32>
    %63 = vector.shape_cast %62 : vector<2x1x80xf32> to vector<2x80xf32>
    %64 = vector.broadcast %61 : f32 to vector<2x80xf32>
    %65 = arith.mulf %64, %63 : vector<2x80xf32>
    %66 = arith.addf %60, %65 : vector<2x80xf32>
    %c1_26 = arith.constant 1 : index
    %c0_27 = arith.constant 0 : index
    %67 = memref.load %arg4[%c1_26, %c0_27] : memref<2x1xf32, #tpu.memory_space<smem>>
    %cst_28 = arith.constant 0.000000e+00 : f32
    %68 = vector.broadcast %cst_28 : f32 to vector<2x80xf32>
    %69 = arith.maximumf %66, %68 : vector<2x80xf32>
    %70 = vector.broadcast %67 : f32 to vector<2x80xf32>
    %71 = arith.mulf %70, %69 : vector<2x80xf32>
    %72 = arith.addf %38, %71 : vector<2x80xf32>
    %cst_29 = arith.constant 0.000000e+00 : f32
    %73 = vector.broadcast %cst_29 : f32 to vector<2x80xf32>
    %74 = arith.subf %73, %72 : vector<2x80xf32>
    %75 = math.exp %74 : vector<2x80xf32>
    %cst_30 = arith.constant 1.000000e+00 : f32
    %76 = vector.broadcast %cst_30 : f32 to vector<2x80xf32>
    %77 = arith.addf %76, %75 : vector<2x80xf32>
    %cst_31 = arith.constant 1.000000e+00 : f32
    %78 = vector.broadcast %cst_31 : f32 to vector<2x80xf32>
    %79 = arith.divf %78, %77 : vector<2x80xf32>
    %c0_32 = arith.constant 0 : index
    %c0_33 = arith.constant 0 : index
    %80 = vector.load %arg1[%c0_32, %c0_33] : memref<1x80xf32, #tpu.memory_space<vmem>>, vector<1x80xf32>
    %81 = vector.broadcast %80 : vector<1x80xf32> to vector<2x80xf32>
    %82 = arith.mulf %79, %81 : vector<2x80xf32>
    %83 = vector.shape_cast %82 : vector<2x80xf32> to vector<2x1x80xf32>
    %84 = vector.broadcast %83 : vector<2x1x80xf32> to vector<2x4x80xf32>
    %85 = arith.mulf %0, %84 : vector<2x4x80xf32>
    %86 = arith.addf %85, %0 : vector<2x4x80xf32>
    %c0_34 = arith.constant 0 : index
    %c0_35 = arith.constant 0 : index
    %c0_36 = arith.constant 0 : index
    %87 = vector.load %arg6[%c0_34, %c0_35, %c0_36] : memref<2x4x80xf32, #tpu.memory_space<vmem>>, vector<2x4x80xf32>
    tpu.vector_store %arg6[%c0_34, %c0_35, %c0_36], %86 {strides = array<i32>} : memref<2x4x80xf32, #tpu.memory_space<vmem>>, vector<2x4x80xf32>,
    return
  }
}

</mosaic_0001>

<llo_original>
// kernel: tpu_custom_call.1
$region0: #{tpu_custom_call.1}
  #allocation0 [shape = 'u32[]', space=smem, size = 0x4, offset = 0x4, fixed_abs, tag = 'smem constant byte address 0x4 - core index']
  #allocation1 [shape = 'u32[144,128]{1,0:T(1,128)}', space=vmem, size = 0x12000, scoped, tag = 'internal scratch']
  #allocation2 [shape = 'f32[1,1]{1,0:T(1,128)S(6)}', space=smem, size = 0x200, scoped, tag = 'scoped memory for tpu_custom_call.1']
  %s0 = inlined_call_operand.vmem [shape: f32[2,4,80], index: 0, kind: input, shape index: {}]
  %s1 = inlined_call_operand.vmem [shape: f32[1,80], index: 1, kind: input, shape index: {}]
  %s2 = inlined_call_operand.vmem [shape: f32[4,2], index: 2, kind: input, shape index: {}]
  %s3 = inlined_call_operand.vmem [shape: f32[1,2], index: 3, kind: input, shape index: {}]
  %s4 = inlined_call_operand.vmem [shape: f32[2,1], index: 4, kind: input, shape index: {}]
  %s5 = inlined_call_operand.<no memory space> [shape: f32[1,1], index: 5, kind: input, shape index: {}]
  %s6 = inlined_call_operand.hbm [shape: f32[2,4,80], index: 6, kind: output, shape index: {}]
  %s7 = sld [smem:[#allocation0]]
  $region46: #{tpu_custom_call.1} parent=0
    _
  %s9 = ssub.s32 1, %s7
  %s10 = scalar_select 0, %s9, %s7
  %11 = sst [smem:[#allocation2]] %s5
  $region1: #{tpu_custom_call.1} parent=0
    #allocation3 [shape = 'u8[2048]{0}', space=smem, size = 0x800, scoped, tag = 'input window, operand 2, single buffered']
    #allocation4 [shape = 's32[1]{0}', space=sflag, size = 0x4, scoped, tag = 'scoped memory for tpu_custom_call.1']
    #allocation5 [shape = 's32[1]{0}', space=sflag, size = 0x4, scoped, tag = 'scoped memory for tpu_custom_call.1']
    #allocation6 [shape = 'u8[512]{0}', space=smem, size = 0x200, scoped, tag = 'input window, operand 3, single buffered']
    #allocation7 [shape = 's32[1]{0}', space=sflag, size = 0x4, scoped, tag = 'scoped memory for tpu_custom_call.1']
    #allocation8 [shape = 'u8[1024]{0}', space=smem, size = 0x400, scoped, tag = 'input window, operand 4, single buffered']
    #allocation9 [shape = 'u8[4096]{0}', space=vmem, size = 0x1000, scoped, tag = 'output window, operand 0, single buffered']
    %12 = vsyncpa [#allocation5], 0
    %13 = vsyncpa [#allocation7], 0
    %14 = vsyncpa [#allocation4], 0
    // Predicated region
    $region2: #{tpu_custom_call.1} parent=1 // pred_check
      _
    $region3: #{tpu_custom_call.1} parent=1 // pred_check_branch
      %16 = sbr.rel (0) target = $region5
    $region4: #{tpu_custom_call.1} parent=1 // pred_region
      _
    $region5: #{tpu_custom_call.1} parent=1 // pred_fallthru
      _
    // Predicated region
    $region6: #{tpu_custom_call.1} parent=1 // pred_check
      _
    $region7: #{tpu_custom_call.1} parent=1 // pred_check_branch
      %18 = sbr.rel (0) target = $region9
    $region8: #{tpu_custom_call.1} parent=1 // pred_region
      _
    $region9: #{tpu_custom_call.1} parent=1 // pred_fallthru
      _
    // Predicated region
    $region10: #{tpu_custom_call.1} parent=1 // pred_check
      _
    $region11: #{tpu_custom_call.1} parent=1 // pred_check_branch
      %20 = sbr.rel (0) target = $region13
    $region12: #{tpu_custom_call.1} parent=1 // pred_region
      %s22 = ssub.s32 64, 64
      %23 = vsyncadd [#allocation5], %s22
      %s25 = sshll.u32 %s2, 4
      %s26 = int_to_ptr.vmem [resolvable:$true] %s25
      %28 = dma.vmem_to_smem %s26, 64, [#allocation3], [#allocation5]
    $region13: #{tpu_custom_call.1} parent=1 // pred_fallthru
      _
    // Predicated region
    $region14: #{tpu_custom_call.1} parent=1 // pred_check
      _
    $region15: #{tpu_custom_call.1} parent=1 // pred_check_branch
      %30 = sbr.rel (0) target = $region17
    $region16: #{tpu_custom_call.1} parent=1 // pred_region
      %s32 = ssub.s32 16, 16
      %33 = vsyncadd [#allocation7], %s32
      %s35 = sshll.u32 %s3, 4
      %s36 = int_to_ptr.vmem [resolvable:$true] %s35
      %38 = dma.vmem_to_smem %s36, 16, [#allocation6], [#allocation7]
    $region17: #{tpu_custom_call.1} parent=1 // pred_fallthru
      _
    // Predicated region
    $region18: #{tpu_custom_call.1} parent=1 // pred_check
      _
    $region19: #{tpu_custom_call.1} parent=1 // pred_check_branch
      %40 = sbr.rel (0) target = $region21
    $region20: #{tpu_custom_call.1} parent=1 // pred_region
      %s42 = ssub.s32 32, 32
      %43 = vsyncadd [#allocation7], %s42
      %s45 = sshll.u32 %s4, 4
      %s46 = int_to_ptr.vmem [resolvable:$true] %s45
      %48 = dma.vmem_to_smem %s46, 32, [#allocation8], [#allocation7]
    $region21: #{tpu_custom_call.1} parent=1 // pred_fallthru
      _
    // Predicated region
    $region22: #{tpu_custom_call.1} parent=1 // pred_check
      _
    $region23: #{tpu_custom_call.1} parent=1 // pred_check_branch
      %50 = sbr.rel (0) target = $region25
    $region24: #{tpu_custom_call.1} parent=1 // pred_region
      _
    $region25: #{tpu_custom_call.1} parent=1 // pred_fallthru
      _
    // Predicated region
    $region26: #{tpu_custom_call.1} parent=1 // pred_check
      _
    $region27: #{tpu_custom_call.1} parent=1 // pred_check_branch
      %52 = sbr.rel (0) target = $region29
    $region28: #{tpu_custom_call.1} parent=1 // pred_region
      %53 = dma.done [#allocation5], 64
    $region29: #{tpu_custom_call.1} parent=1 // pred_fallthru
      _
    // Predicated region
    $region30: #{tpu_custom_call.1} parent=1 // pred_check
      _
    $region31: #{tpu_custom_call.1} parent=1 // pred_check_branch
      %55 = sbr.rel (0) target = $region33
    $region32: #{tpu_custom_call.1} parent=1 // pred_region
      %56 = dma.done [#allocation7], 16
    $region33: #{tpu_custom_call.1} parent=1 // pred_fallthru
      _
    // Predicated region
    $region34: #{tpu_custom_call.1} parent=1 // pred_check
      _
    $region35: #{tpu_custom_call.1} parent=1 // pred_check_branch
      %58 = sbr.rel (0) target = $region37
    $region36: #{tpu_custom_call.1} parent=1 // pred_region
      %59 = dma.done [#allocation7], 32
    $region37: #{tpu_custom_call.1} parent=1 // pred_fallthru
      _
    %60 = sfence
    %v61 = vld [vmem:[%s0] sm:$0xf]
    %v62 = vld [vmem:[%s0 + $0x4] sm:$0xf]
    %s63 = sld [smem:[#allocation2]]
    %v64 = vstv %s63
    %v65 = vadd.f32 %v64, 0.0
    %s66 = sld [smem:[#allocation6]]
    %v67 = vstv %s66
    %v68 = vadd.f32 %v67, 0.0
    %s69 = sld [smem:[#allocation3]]
    %v70 = vstv %s69
    %v71 = vmul.f32 %v70, %v61
    %v72 = vmul.f32 %v70, %v62
    %v73 = vadd.f32 %v68, %v71
    %v74 = vadd.f32 %v68, %v72
    %s75 = sld [smem:[#allocation3 + $0x80]]
    %v76 = vstv %s75
    %v77 = vmul.f32 %v76, %v61
    %v78 = vmul.f32 %v76, %v62
    %v81 = vrot.slane %v77, 1
    %v82 = vrot.slane %v78, 1
    %v85 = vadd.f32 %v73, %v81
    %v86 = vadd.f32 %v74, %v82
    %s87 = sld [smem:[#allocation3 + $0x100]]
    %v88 = vstv %s87
    %v89 = vmul.f32 %v88, %v61
    %v90 = vmul.f32 %v88, %v62
    %v93 = vrot.slane %v89, 2
    %v94 = vrot.slane %v90, 2
    %v97 = vadd.f32 %v85, %v93
    %v98 = vadd.f32 %v86, %v94
    %s99 = sld [smem:[#allocation3 + $0x180]]
    %v100 = vstv %s99
    %v101 = vmul.f32 %v100, %v61
    %v102 = vmul.f32 %v100, %v62
    %v105 = vrot.slane %v101, 3
    %v106 = vrot.slane %v102, 3
    %v109 = vadd.f32 %v97, %v105
    %v110 = vadd.f32 %v98, %v106
    %s111 = sld [smem:[#allocation8]]
    %v112 = vmax.f32 %v109, 0.0
    %v113 = vmax.f32 %v110, 0.0
    %v114 = vstv %s111
    %v115 = vmul.f32 %v114, %v112
    %v116 = vmul.f32 %v114, %v113
    %v117 = vadd.f32 %v65, %v115
    %v118 = vadd.f32 %v65, %v116
    %s119 = sld [smem:[#allocation6 + $0x1]]
    %v120 = vstv %s119
    %v121 = vadd.f32 %v120, 0.0
    %s122 = sld [smem:[#allocation3 + $0x1]]
    %v123 = vstv %s122
    %v124 = vmul.f32 %v123, %v61
    %v125 = vmul.f32 %v123, %v62
    %v126 = vadd.f32 %v121, %v124
    %v127 = vadd.f32 %v121, %v125
    %s128 = sld [smem:[#allocation3 + $0x81]]
    %v129 = vstv %s128
    %v130 = vmul.f32 %v129, %v61
    %v131 = vmul.f32 %v129, %v62
    %v134 = vrot.slane %v130, 1
    %v135 = vrot.slane %v131, 1
    %v138 = vadd.f32 %v126, %v134
    %v139 = vadd.f32 %v127, %v135
    %s140 = sld [smem:[#allocation3 + $0x101]]
    %v141 = vstv %s140
    %v142 = vmul.f32 %v141, %v61
    %v143 = vmul.f32 %v141, %v62
    %v146 = vrot.slane %v142, 2
    %v147 = vrot.slane %v143, 2
    %v150 = vadd.f32 %v138, %v146
    %v151 = vadd.f32 %v139, %v147
    %s152 = sld [smem:[#allocation3 + $0x181]]
    %v153 = vstv %s152
    %v154 = vmul.f32 %v153, %v61
    %v155 = vmul.f32 %v153, %v62
    %v158 = vrot.slane %v154, 3
    %v159 = vrot.slane %v155, 3
    %v162 = vadd.f32 %v150, %v158
    %v163 = vadd.f32 %v151, %v159
    %s164 = sld [smem:[#allocation8 + $0x80]]
    %v165 = vmax.f32 %v162, 0.0
    %v166 = vmax.f32 %v163, 0.0
    %v167 = vstv %s164
    %v168 = vmul.f32 %v167, %v165
    %v169 = vmul.f32 %v167, %v166
    %v170 = vadd.f32 %v117, %v168
    %v171 = vadd.f32 %v118, %v169
    %v172 = vsub.f32 0.0, %v170
    %v173 = vsub.f32 0.0, %v171
    %v174 = vmul.f32 %v172, 1.442695
    %v175 = vpow.pop %v174
    %v176 = vmul.f32 %v173, 1.442695
    %v177 = vpow.pop %v176
    %v178 = vadd.f32 %v175, 1.0
    %v179 = vadd.f32 %v177, 1.0
    %v180 = vrcp.pop %v178
    %v181 = vmul.f32 1.0, %v180
    %v182 = vrcp.pop %v179
    %v183 = vmul.f32 1.0, %v182
    %v184 = vld [vmem:[%s1] sm:$0x1]
    %v186 = vlaneseq
    %v187 = vshrl.u32 %v186, 7
    %v188 = vsub.s32 0, %v187
    %v189 = vrot.slane %v184, %v188
    %v191 = vmul.f32 %v181, %v189
    %v192 = vmul.f32 %v183, %v189
    %v193 = vlaneseq
    %v194 = vshrl.u32 %v193, 7
    %v195 = vsub.s32 0, %v194
    %v196 = vrot.slane %v191, %v195
    %v197 = vlaneseq
    %v198 = vshrl.u32 %v197, 7
    %v199 = vsub.s32 0, %v198
    %v200 = vrot.slane %v192, %v199
    %v201 = vmul.f32 %v61, %v196
    %v202 = vmul.f32 %v62, %v200
    %v203 = vadd.f32 %v201, %v61
    %v204 = vadd.f32 %v202, %v62
    %vm205 = vcmask 650240
    %206 = vst.msk [vmem:[#allocation9] sm:$0xf] %vm205, %v203
    %207 = vst.msk [vmem:[#allocation9 + $0x4] sm:$0xf] %vm205, %v204
    // Predicated region
    $region38: #{tpu_custom_call.1} parent=1 // pred_check
      _
    $region39: #{tpu_custom_call.1} parent=1 // pred_check_branch
      %209 = sbr.rel (0) target = $region41
    $region40: #{tpu_custom_call.1} parent=1 // pred_region
      %s211 = ssub.s32 128, 128
      %212 = vsyncadd [#allocation4], %s211
      %s213 = sshll.u32 [#allocation9], 4
      %s214 = int_to_ptr.vmem [resolvable:$true] %s213
      %219 = dma.vmem_to_hbm [thread:$0]  %s214, 128, %s6, [#allocation4], 64, 64, 4
    $region41: #{tpu_custom_call.1} parent=1 // pred_fallthru
      _
    // Predicated region
    $region42: #{tpu_custom_call.1} parent=1 // pred_check
      _
    $region43: #{tpu_custom_call.1} parent=1 // pred_check_branch
      %221 = sbr.rel (0) target = $region45
    $region44: #{tpu_custom_call.1} parent=1 // pred_region
      %222 = dma.done [#allocation4], 128
    $region45: #{tpu_custom_call.1} parent=1 // pred_fallthru
      _
    %223 = vsyncpa [#allocation4], 1
    %224 = vsyncpa [#allocation5], 1
    %225 = vsyncpa [#allocation7], 1

</llo_original>
